<compile_context>
chip_gen: v7x
topology: tpu7x:2x2x1
jax: 0.10.0
libtpu: 0.0.40
codegen_flags: <defaults>
</compile_context>

<pallas_src>
import jax
import jax.numpy as jnp
import numpy as np
from jax.experimental import pallas as pl
from jax.experimental.pallas import tpu as pltpu

# ----------------------------- module hyperparameters (defaults, resnet18) ----
PREF_DIM = 40
PREF_EMB_DIM = 32
CHUNK_EMB_DIM = 64
HIDDEN = 100
NUM_CHUNKS = 105
NUM_WS = 11
W_DIM = 10000
OUT_DIM = 10
LAST_DIM = 512

TOTAL_W = NUM_WS * W_DIM            # 110000 valid output columns per chunk
TILE_N = 11008                      # 128*86 -> lane-dense tiles
N_PAD = 110080                      # 128*860; N_PAD / TILE_N = 10 (even) grid steps
assert N_PAD % TILE_N == 0 and N_PAD >= TOTAL_W and TILE_N % 128 == 0
# TODO(synk): on 128 MiB-VMEM v5e/v6e, TILE_N=27520 (4 steps) with
# vmem_limit_bytes~56 MiB shaves a bit more per-step overhead; not shipped as
# default because it leaves no headroom on v7x (64 MiB VMEM).


# ----------------------------- layer_to_shape (resnet18) ----------------------
def build_layer_to_shape():
    d = {'resnet.conv1.weight': (64, 3, 7, 7),
         'resnet.bn1.weight': (64,), 'resnet.bn1.bias': (64,)}

    def basic_block(layer, i, cin, cout, downsample):
        p = f'resnet.layer{layer}.{i}.'
        bd = {p + 'conv1.weight': (cout, cin, 3, 3),
              p + 'bn1.weight': (cout,), p + 'bn1.bias': (cout,),
              p + 'conv2.weight': (cout, cout, 3, 3),
              p + 'bn2.weight': (cout,), p + 'bn2.bias': (cout,)}
        if downsample:
            bd[p + 'downsample.0.weight'] = (cout, cin, 1, 1)
            bd[p + 'downsample.1.weight'] = (cout,)
            bd[p + 'downsample.1.bias'] = (cout,)
        return bd

    cin = 64
    for li, cout in enumerate([64, 128, 256, 512], start=1):
        for i in range(2):                       # resnet18: [2, 2, 2, 2]
            ds = (i == 0 and li != 1)
            d.update(basic_block(li, i, cin if i == 0 else cout, cout, ds))
        cin = cout
    for t in range(PREF_DIM):
        d[f'task{t + 1}.weight'] = (OUT_DIM, LAST_DIM)
        d[f'task{t + 1}.bias'] = (OUT_DIM,)
    return d


# ----------------------------- kernel 1: one-shot rep-MLP ----------------------
def rep_kernel(pref_ref, pmat_ref, cemb_ref,
               w1a_ref, w1b_ref, b1_ref,
               w2_ref, b2_ref, w3_ref, b3_ref, rep_ref):
    # pref embedding: (1,40) @ (40,32)
    pref_emb = jnp.dot(pref_ref[...], pmat_ref[...],
                       preferred_element_type=jnp.float32)            # (1, 32)
    # first Linear split over [pref_emb | chunk_emb] -> no concat needed
    h = (jnp.dot(pref_emb, w1a_ref[...], preferred_element_type=jnp.float32)
         + jnp.dot(cemb_ref[...], w1b_ref[...], preferred_element_type=jnp.float32)
         + b1_ref[...])                                                # (105, 100)
    h = jnp.maximum(h, 0.0)
    h = jnp.maximum(jnp.dot(h, w2_ref[...], preferred_element_type=jnp.float32)
                    + b2_ref[...], 0.0)
    rep = jnp.dot(h, w3_ref[...], preferred_element_type=jnp.float32) + b3_ref[...]
    rep_ref[...] = rep.astype(rep_ref.dtype)                          # -> bf16


# ----------------------------- kernel 2: tiled projection ----------------------
def proj_kernel(rep_ref, wkn_ref, o_ref):
    # (105,100)bf16 @ (100,TILE_N)bf16 -> native bf16 MXU, f32 accumulate
    o_ref[...] = jnp.dot(rep_ref[...], wkn_ref[...],
                         preferred_element_type=jnp.float32)


# ----------------------------- wrapper -----------------------------------------
def hyper_forward_padded(preference, params):
    """Returns the padded (NUM_CHUNKS, N_PAD) f32 weight matrix; cols >= TOTAL_W are 0."""
    # pre-transpose first Linear and split it into pref / chunk halves
    w1_t = params['fc1_w'].T                      # (96, HIDDEN)
    w1a = w1_t[:PREF_EMB_DIM]                     # (32, HIDDEN)
    w1b = w1_t[PREF_EMB_DIM:]                     # (64, HIDDEN)

    small = lambda r, c: pl.BlockSpec((r, c), lambda j: (0, 0))

    # --- one-shot rep-MLP (hoisted out of the big grid) ---
    rep_bf16 = pl.pallas_call(
        rep_kernel,
        out_shape=jax.ShapeDtypeStruct((NUM_CHUNKS, HIDDEN), jnp.bfloat16),
        grid_spec=pltpu.PrefetchScalarGridSpec(
            num_scalar_prefetch=0,
            grid=(1,),
            in_specs=[
                small(1, PREF_DIM),
                small(PREF_DIM, PREF_EMB_DIM),
                small(NUM_CHUNKS, CHUNK_EMB_DIM),
                small(PREF_EMB_DIM, HIDDEN),
                small(CHUNK_EMB_DIM, HIDDEN),
                small(1, HIDDEN),
                small(HIDDEN, HIDDEN),
                small(1, HIDDEN),
                small(HIDDEN, HIDDEN),
                small(1, HIDDEN),
            ],
            out_specs=pl.BlockSpec((NUM_CHUNKS, HIDDEN), lambda j: (0, 0)),
        ),
        compiler_params=pltpu.CompilerParams(
            dimension_semantics=("arbitrary",)),
    )(preference.reshape(1, PREF_DIM),
      params['pref_emb'], params['chunk_emb'],
      w1a, w1b, params['fc1_b'].reshape(1, HIDDEN),
      params['fc2_w'].T, params['fc2_b'].reshape(1, HIDDEN),
      params['fc3_w'].T, params['fc3_b'].reshape(1, HIDDEN))

    # --- tiled HBM-bound projection: rep @ wkn ---
    grid = (N_PAD // TILE_N,)                     # 10 steps (even -> megacore split)
    return pl.pallas_call(
        proj_kernel,
        out_shape=jax.ShapeDtypeStruct((NUM_CHUNKS, N_PAD), jnp.float32),
        grid_spec=pltpu.PrefetchScalarGridSpec(
            num_scalar_prefetch=0,
            grid=grid,
            in_specs=[
                pl.BlockSpec((NUM_CHUNKS, HIDDEN), lambda j: (0, 0)),
                # hyper-weights in (K, N) orientation: native MXU feed, bf16.
                pl.BlockSpec((HIDDEN, TILE_N), lambda j: (0, j),
                             pipeline_mode=pl.Buffered(3)),
            ],
            out_specs=pl.BlockSpec((NUM_CHUNKS, TILE_N), lambda j: (0, j)),
        ),
        compiler_params=pltpu.CompilerParams(
            dimension_semantics=("parallel",),
            # > v5e's 16 MiB default scoped VMEM (physical is 128 MiB, so safe);
            # also fits v7x's 64 MiB physical VMEM with headroom.
            vmem_limit_bytes=32 * 1024 * 1024),
    )(rep_bf16, params['w_kn_pad'])


def build_out_dict(out_pad, layer_to_shape):
    """Slice layers straight out of the padded 2-D output (no flat weight_vector)."""
    out_dict = {}
    pos = 0
    for name, shape in layer_to_shape.items():
        n = int(np.prod(shape))
        r0, c0 = divmod(pos, TOTAL_W)             # static python ints
        r1 = (pos + n - 1) // TOTAL_W
        if r0 == r1:
            flat = out_pad[r0, c0:c0 + n]
        else:
            # layer straddles chunk rows: de-pad only the rows it touches
            flat = out_pad[r0:r1 + 1, :TOTAL_W].reshape(-1)[c0:c0 + n]
        out_dict[name] = flat.reshape(shape)
        pos += n
    assert pos <= NUM_CHUNKS * TOTAL_W
    return out_dict


def hyper_resnet_mlp_forward(preference, params, layer_to_shape):
    out_pad = hyper_forward_padded(preference, params)
    return build_out_dict(out_pad, layer_to_shape), out_pad


# ----------------------------- pure-JAX reference ------------------------------
def reference_weight_matrix(preference, params):
    pref_emb = preference @ params['pref_emb']                      # (32,)
    x = jnp.concatenate(
        [jnp.broadcast_to(pref_emb, (NUM_CHUNKS, PREF_EMB_DIM)),
         params['chunk_emb']], axis=-1)                             # (105, 96)
    h = jnp.maximum(x @ params['fc1_w'].T + params['fc1_b'], 0.0)
    h = jnp.maximum(h @ params['fc2_w'].T + params['fc2_b'], 0.0)
    rep = h @ params['fc3_w'].T + params['fc3_b']                   # (105, 100)
    # mirror the kernel's bf16 storage of rep / hyper-weights
    rep_bf = rep.astype(jnp.bfloat16).astype(jnp.float32)
    w = params['w_kn_pad'][:, :TOTAL_W].astype(jnp.float32)
    return jnp.dot(rep_bf, w, precision=jax.lax.Precision.HIGHEST)  # (105, 110000)


# ----------------------------- parameter init ----------------------------------
def init_params(key):
    ks = jax.random.split(key, 10)
    fan = PREF_EMB_DIM + CHUNK_EMB_DIM
    params = {
        'pref_emb': 0.1 * jax.random.normal(ks[0], (PREF_DIM, PREF_EMB_DIM), jnp.float32),
        'chunk_emb': 0.1 * jax.random.normal(ks[1], (NUM_CHUNKS, CHUNK_EMB_DIM), jnp.float32),
        'fc1_w': jax.random.uniform(ks[2], (HIDDEN, fan), jnp.float32,
                                    -1.0 / np.sqrt(fan), 1.0 / np.sqrt(fan)),
        'fc1_b': jax.random.uniform(ks[3], (HIDDEN,), jnp.float32,
                                    -1.0 / np.sqrt(fan), 1.0 / np.sqrt(fan)),
        'fc2_w': jax.random.uniform(ks[4], (HIDDEN, HIDDEN), jnp.float32,
                                    -1.0 / np.sqrt(HIDDEN), 1.0 / np.sqrt(HIDDEN)),
        'fc2_b': jax.random.uniform(ks[5], (HIDDEN,), jnp.float32,
                                    -1.0 / np.sqrt(HIDDEN), 1.0 / np.sqrt(HIDDEN)),
        'fc3_w': jax.random.uniform(ks[6], (HIDDEN, HIDDEN), jnp.float32,
                                    -1.0 / np.sqrt(HIDDEN), 1.0 / np.sqrt(HIDDEN)),
        'fc3_b': jax.random.uniform(ks[7], (HIDDEN,), jnp.float32,
                                    -1.0 / np.sqrt(HIDDEN), 1.0 / np.sqrt(HIDDEN)),
    }
    # ws: num_ws matrices of shape (w_dim, hidden); torch.cat([F.linear(rep, w)], dim=1)
    # means output columns are stacked in w order. Stored pre-transposed as
    # (HIDDEN, num_ws*w_dim), zero-padded along the column axis to N_PAD, in bf16
    # (halves the dominant HBM read on this memory-bound kernel).
    w_kn = 0.1 * jax.random.normal(ks[8], (HIDDEN, TOTAL_W), jnp.float32)
    params['w_kn_pad'] = jnp.pad(
        w_kn, ((0, 0), (0, N_PAD - TOTAL_W))).astype(jnp.bfloat16)
    return params


# ----------------------------- main ---------------------------------------------
if __name__ == "__main__":
    key = jax.random.PRNGKey(0)
    k_param, k_pref = jax.random.split(key)
    params = init_params(k_param)
    layer_to_shape = build_layer_to_shape()

    # input: a single preference vector of length 40 (as the forward implies)
    preference = jax.nn.softmax(jax.random.normal(k_pref, (PREF_DIM,), jnp.float32))

    out_dict, out_pad = hyper_resnet_mlp_forward(preference, params, layer_to_shape)
    jax.block_until_ready(out_pad)

    # ---- correctness check (test-only; not on the production path) ----
    ref = np.asarray(reference_weight_matrix(preference, params))      # (105, 110000)
    got = np.asarray(out_pad)[:, :TOTAL_W]
    # bf16 storage of rep + hyper-weights -> loosened tolerances vs the f32 build
    np.testing.assert_allclose(got, ref, rtol=1e-2, atol=2e-3)

    # validate the direct 2-D span extraction against independent flat slicing
    ref_flat = ref.reshape(-1)
    pos = 0
    for name, shape in layer_to_shape.items():
        n = int(np.prod(shape))
        got_layer = np.asarray(out_dict[name])
        assert got_layer.shape == shape
        np.testing.assert_allclose(got_layer.reshape(-1),
                                   ref_flat[pos:pos + n], rtol=1e-2, atol=2e-3)
        pos += n

    print("KERNEL_OK")
</pallas_src>

<mosaic_0001>
module attributes {stable_mosaic.version = 11 : i64} {
  func.func @rep_kernel(%arg0: i32, %arg1: memref<1x40xf32, #tpu.memory_space<vmem>>, %arg2: memref<40x32xf32, #tpu.memory_space<vmem>>, %arg3: memref<105x64xf32, #tpu.memory_space<vmem>>, %arg4: memref<32x100xf32, #tpu.memory_space<vmem>>, %arg5: memref<64x100xf32, #tpu.memory_space<vmem>>, %arg6: memref<1x100xf32, #tpu.memory_space<vmem>>, %arg7: memref<100x100xf32, #tpu.memory_space<vmem>>, %arg8: memref<1x100xf32, #tpu.memory_space<vmem>>, %arg9: memref<100x100xf32, #tpu.memory_space<vmem>>, %arg10: memref<1x100xf32, #tpu.memory_space<vmem>>, %arg11: memref<105x100xbf16, #tpu.memory_space<vmem>>) attributes {dimension_semantics = [#tpu.dimension_semantics<arbitrary>], iteration_bounds = array<i64: 1>, scalar_prefetch = 0 : i64, scratch_operands = 0 : i64, tpu.core_type = #tpu.core_type<tc>, window_params = [{pipeline_mode = #tpu.pipeline_mode<synchronous>, transform_indices = @transform_0, window_bounds = array<i64: 1, 40>}, {pipeline_mode = #tpu.pipeline_mode<synchronous>, transform_indices = @transform_1, window_bounds = array<i64: 40, 32>}, {pipeline_mode = #tpu.pipeline_mode<synchronous>, transform_indices = @transform_2, window_bounds = array<i64: 105, 64>}, {pipeline_mode = #tpu.pipeline_mode<synchronous>, transform_indices = @transform_3, window_bounds = array<i64: 32, 100>}, {pipeline_mode = #tpu.pipeline_mode<synchronous>, transform_indices = @transform_4, window_bounds = array<i64: 64, 100>}, {pipeline_mode = #tpu.pipeline_mode<synchronous>, transform_indices = @transform_5, window_bounds = array<i64: 1, 100>}, {pipeline_mode = #tpu.pipeline_mode<synchronous>, transform_indices = @transform_6, window_bounds = array<i64: 100, 100>}, {pipeline_mode = #tpu.pipeline_mode<synchronous>, transform_indices = @transform_7, window_bounds = array<i64: 1, 100>}, {pipeline_mode = #tpu.pipeline_mode<synchronous>, transform_indices = @transform_8, window_bounds = array<i64: 100, 100>}, {pipeline_mode = #tpu.pipeline_mode<synchronous>, transform_indices = @transform_9, window_bounds = array<i64: 1, 100>}, {pipeline_mode = #tpu.pipeline_mode<synchronous>, transform_indices = @transform_10, window_bounds = array<i64: 105, 100>}]} {
    %c0 = arith.constant 0 : index
    %c0_0 = arith.constant 0 : index
    %0 = vector.load %arg1[%c0, %c0_0] : memref<1x40xf32, #tpu.memory_space<vmem>>, vector<1x40xf32>
    %c0_1 = arith.constant 0 : index
    %c0_2 = arith.constant 0 : index
    %1 = vector.load %arg2[%c0_1, %c0_2] : memref<40x32xf32, #tpu.memory_space<vmem>>, vector<40x32xf32>
    %cst = arith.constant dense<0.000000e+00> : vector<1x32xf32>
    %2 = tpu.matmul %0, %1, %cst {dimension_numbers = #tpu.dot_dimension_numbers<[1], [0], [0], [1], [0, 0, 1, 1], [], []>} : vector<1x40xf32>, vector<40x32xf32>, vector<1x32xf32> -> vector<1x32xf32>
    %c0_3 = arith.constant 0 : index
    %c0_4 = arith.constant 0 : index
    %3 = vector.load %arg4[%c0_3, %c0_4] : memref<32x100xf32, #tpu.memory_space<vmem>>, vector<32x100xf32>
    %cst_5 = arith.constant dense<0.000000e+00> : vector<1x100xf32>
    %4 = tpu.matmul %2, %3, %cst_5 {dimension_numbers = #tpu.dot_dimension_numbers<[1], [0], [0], [1], [0, 0, 1, 1], [], []>} : vector<1x32xf32>, vector<32x100xf32>, vector<1x100xf32> -> vector<1x100xf32>
    %c0_6 = arith.constant 0 : index
    %c0_7 = arith.constant 0 : index
    %5 = vector.load %arg3[%c0_6, %c0_7] : memref<105x64xf32, #tpu.memory_space<vmem>>, vector<105x64xf32>
    %c0_8 = arith.constant 0 : index
    %c0_9 = arith.constant 0 : index
    %6 = vector.load %arg5[%c0_8, %c0_9] : memref<64x100xf32, #tpu.memory_space<vmem>>, vector<64x100xf32>
    %cst_10 = arith.constant dense<0.000000e+00> : vector<105x100xf32>
    %7 = tpu.matmul %5, %6, %cst_10 {dimension_numbers = #tpu.dot_dimension_numbers<[1], [0], [0], [1], [0, 0, 1, 1], [], []>} : vector<105x64xf32>, vector<64x100xf32>, vector<105x100xf32> -> vector<105x100xf32>
    %8 = vector.broadcast %4 : vector<1x100xf32> to vector<105x100xf32>
    %9 = arith.addf %8, %7 : vector<105x100xf32>
    %c0_11 = arith.constant 0 : index
    %c0_12 = arith.constant 0 : index
    %10 = vector.load %arg6[%c0_11, %c0_12] : memref<1x100xf32, #tpu.memory_space<vmem>>, vector<1x100xf32>
    %11 = vector.broadcast %10 : vector<1x100xf32> to vector<105x100xf32>
    %12 = arith.addf %9, %11 : vector<105x100xf32>
    %cst_13 = arith.constant 0.000000e+00 : f32
    %13 = vector.broadcast %cst_13 : f32 to vector<105x100xf32>
    %14 = arith.maximumf %12, %13 : vector<105x100xf32>
    %c0_14 = arith.constant 0 : index
    %c0_15 = arith.constant 0 : index
    %15 = vector.load %arg7[%c0_14, %c0_15] : memref<100x100xf32, #tpu.memory_space<vmem>>, vector<100x100xf32>
    %cst_16 = arith.constant dense<0.000000e+00> : vector<105x100xf32>
    %16 = tpu.matmul %14, %15, %cst_16 {dimension_numbers = #tpu.dot_dimension_numbers<[1], [0], [0], [1], [0, 0, 1, 1], [], []>} : vector<105x100xf32>, vector<100x100xf32>, vector<105x100xf32> -> vector<105x100xf32>
    %c0_17 = arith.constant 0 : index
    %c0_18 = arith.constant 0 : index
    %17 = vector.load %arg8[%c0_17, %c0_18] : memref<1x100xf32, #tpu.memory_space<vmem>>, vector<1x100xf32>
    %18 = vector.broadcast %17 : vector<1x100xf32> to vector<105x100xf32>
    %19 = arith.addf %16, %18 : vector<105x100xf32>
    %cst_19 = arith.constant 0.000000e+00 : f32
    %20 = vector.broadcast %cst_19 : f32 to vector<105x100xf32>
    %21 = arith.maximumf %19, %20 : vector<105x100xf32>
    %c0_20 = arith.constant 0 : index
    %c0_21 = arith.constant 0 : index
    %22 = vector.load %arg9[%c0_20, %c0_21] : memref<100x100xf32, #tpu.memory_space<vmem>>, vector<100x100xf32>
    %cst_22 = arith.constant dense<0.000000e+00> : vector<105x100xf32>
    %23 = tpu.matmul %21, %22, %cst_22 {dimension_numbers = #tpu.dot_dimension_numbers<[1], [0], [0], [1], [0, 0, 1, 1], [], []>} : vector<105x100xf32>, vector<100x100xf32>, vector<105x100xf32> -> vector<105x100xf32>
    %c0_23 = arith.constant 0 : index
    %c0_24 = arith.constant 0 : index
    %24 = vector.load %arg10[%c0_23, %c0_24] : memref<1x100xf32, #tpu.memory_space<vmem>>, vector<1x100xf32>
    %25 = vector.broadcast %24 : vector<1x100xf32> to vector<105x100xf32>
    %26 = arith.addf %23, %25 : vector<105x100xf32>
    %27 = arith.truncf %26 : vector<105x100xf32> to vector<105x100xbf16>
    %c0_25 = arith.constant 0 : index
    %c0_26 = arith.constant 0 : index
    %28 = vector.load %arg11[%c0_25, %c0_26] : memref<105x100xbf16, #tpu.memory_space<vmem>>, vector<105x100xbf16>
    tpu.vector_store %arg11[%c0_25, %c0_26], %27 {strides = array<i32>} : memref<105x100xbf16, #tpu.memory_space<vmem>>, vector<105x100xbf16>,
    return
  }
  func.func @transform_0(%arg0: i32) -> (i32, i32) {
    %c0_i32 = arith.constant 0 : i32
    %c0_i32_0 = arith.constant 0 : i32
    %c0_i32_1 = arith.constant 0 : i32
    return %c0_i32, %c0_i32_0 : i32, i32
  }
  func.func @transform_1(%arg0: i32) -> (i32, i32) {
    %c0_i32 = arith.constant 0 : i32
    %c0_i32_0 = arith.constant 0 : i32
    %c0_i32_1 = arith.constant 0 : i32
    return %c0_i32, %c0_i32_0 : i32, i32
  }
  func.func @transform_2(%arg0: i32) -> (i32, i32) {
    %c0_i32 = arith.constant 0 : i32
    %c0_i32_0 = arith.constant 0 : i32
    %c0_i32_1 = arith.constant 0 : i32
    return %c0_i32, %c0_i32_0 : i32, i32
  }
  func.func @transform_3(%arg0: i32) -> (i32, i32) {
    %c0_i32 = arith.constant 0 : i32
    %c0_i32_0 = arith.constant 0 : i32
    %c0_i32_1 = arith.constant 0 : i32
    return %c0_i32, %c0_i32_0 : i32, i32
  }
  func.func @transform_4(%arg0: i32) -> (i32, i32) {
    %c0_i32 = arith.constant 0 : i32
    %c0_i32_0 = arith.constant 0 : i32
    %c0_i32_1 = arith.constant 0 : i32
    return %c0_i32, %c0_i32_0 : i32, i32
  }
  func.func @transform_5(%arg0: i32) -> (i32, i32) {
    %c0_i32 = arith.constant 0 : i32
    %c0_i32_0 = arith.constant 0 : i32
    %c0_i32_1 = arith.constant 0 : i32
    return %c0_i32, %c0_i32_0 : i32, i32
  }
  func.func @transform_6(%arg0: i32) -> (i32, i32) {
    %c0_i32 = arith.constant 0 : i32
    %c0_i32_0 = arith.constant 0 : i32
    %c0_i32_1 = arith.constant 0 : i32
    return %c0_i32, %c0_i32_0 : i32, i32
  }
  func.func @transform_7(%arg0: i32) -> (i32, i32) {
    %c0_i32 = arith.constant 0 : i32
    %c0_i32_0 = arith.constant 0 : i32
    %c0_i32_1 = arith.constant 0 : i32
    return %c0_i32, %c0_i32_0 : i32, i32
  }
  func.func @transform_8(%arg0: i32) -> (i32, i32) {
    %c0_i32 = arith.constant 0 : i32
    %c0_i32_0 = arith.constant 0 : i32
    %c0_i32_1 = arith.constant 0 : i32
    return %c0_i32, %c0_i32_0 : i32, i32
  }
  func.func @transform_9(%arg0: i32) -> (i32, i32) {
    %c0_i32 = arith.constant 0 : i32
    %c0_i32_0 = arith.constant 0 : i32
    %c0_i32_1 = arith.constant 0 : i32
    return %c0_i32, %c0_i32_0 : i32, i32
  }
  func.func @transform_10(%arg0: i32) -> (i32, i32) {
    %c0_i32 = arith.constant 0 : i32
    %c0_i32_0 = arith.constant 0 : i32
    %c0_i32_1 = arith.constant 0 : i32
    return %c0_i32, %c0_i32_0 : i32, i32
  }
}

</mosaic_0001>

<llo_original>
// kernel: tpu_custom_call.1
$region0: #{tpu_custom_call.1}
  #allocation0 [shape = 'u32[]', space=smem, size = 0x4, offset = 0x4, fixed_abs, tag = 'smem constant byte address 0x4 - core index']
  #allocation1 [shape = 'u32[144,128]{1,0:T(1,128)}', space=vmem, size = 0x12000, scoped, tag = 'internal scratch']
  %s0 = inlined_call_operand.vmem [shape: f32[1,40], index: 0, kind: input, shape index: {}]
  %s1 = inlined_call_operand.vmem [shape: f32[40,32], index: 1, kind: input, shape index: {}]
  %s2 = inlined_call_operand.vmem [shape: f32[105,64], index: 2, kind: input, shape index: {}]
  %s3 = inlined_call_operand.vmem [shape: f32[32,100], index: 3, kind: input, shape index: {}]
  %s4 = inlined_call_operand.hbm [shape: f32[64,100], index: 4, kind: input, shape index: {}]
  %s5 = inlined_call_operand.vmem [shape: f32[1,100], index: 5, kind: input, shape index: {}]
  %s6 = inlined_call_operand.vmem [shape: f32[100,100], index: 6, kind: input, shape index: {}]
  %s7 = inlined_call_operand.vmem [shape: f32[1,100], index: 7, kind: input, shape index: {}]
  %s8 = inlined_call_operand.vmem [shape: f32[100,100], index: 8, kind: input, shape index: {}]
  %s9 = inlined_call_operand.vmem [shape: f32[1,100], index: 9, kind: input, shape index: {}]
  %s10 = inlined_call_operand.vmem [shape: bf16[105,100], index: 10, kind: output, shape index: {}]
  %s11 = sld [smem:[#allocation0]]
  $region54: #{tpu_custom_call.1} parent=0
    _
  %s13 = ssub.s32 1, %s11
  %s14 = scalar_select 0, %s13, %s11
  $region1: #{tpu_custom_call.1} parent=0
    #allocation2 [shape = 'u8[32768]{0}', space=vmem, size = 0x8000, scoped, tag = 'input window, operand 4, single buffered']
    #allocation3 [shape = 's32[1]{0}', space=sflag, size = 0x4, scoped, tag = 'scoped memory for tpu_custom_call.1']
    %15 = vsyncpa [#allocation3], 0
    // Predicated region
    $region2: #{tpu_custom_call.1} parent=1 // pred_check
      _
    $region3: #{tpu_custom_call.1} parent=1 // pred_check_branch
      %17 = sbr.rel (0) target = $region5
    $region4: #{tpu_custom_call.1} parent=1 // pred_region
      _
    $region5: #{tpu_custom_call.1} parent=1 // pred_fallthru
      _
    // Predicated region
    $region6: #{tpu_custom_call.1} parent=1 // pred_check
      _
    $region7: #{tpu_custom_call.1} parent=1 // pred_check_branch
      %19 = sbr.rel (0) target = $region9
    $region8: #{tpu_custom_call.1} parent=1 // pred_region
      _
    $region9: #{tpu_custom_call.1} parent=1 // pred_fallthru
      _
    // Predicated region
    $region10: #{tpu_custom_call.1} parent=1 // pred_check
      _
    $region11: #{tpu_custom_call.1} parent=1 // pred_check_branch
      %21 = sbr.rel (0) target = $region13
    $region12: #{tpu_custom_call.1} parent=1 // pred_region
      _
    $region13: #{tpu_custom_call.1} parent=1 // pred_fallthru
      _
    // Predicated region
    $region14: #{tpu_custom_call.1} parent=1 // pred_check
      _
    $region15: #{tpu_custom_call.1} parent=1 // pred_check_branch
      %23 = sbr.rel (0) target = $region17
    $region16: #{tpu_custom_call.1} parent=1 // pred_region
      _
    $region17: #{tpu_custom_call.1} parent=1 // pred_fallthru
      _
    // Predicated region
    $region18: #{tpu_custom_call.1} parent=1 // pred_check
      _
    $region19: #{tpu_custom_call.1} parent=1 // pred_check_branch
      %25 = sbr.rel (0) target = $region21
    $region20: #{tpu_custom_call.1} parent=1 // pred_region
      %s27 = ssub.s32 1024, 1024
      %28 = vsyncadd [#allocation3], %s27
      %s29 = sshll.u32 [#allocation2], 4
      %s30 = int_to_ptr.vmem [resolvable:$true] %s29
      %35 = dma.hbm_to_vmem [thread:$0]  %s4, 1024, %s30, [#allocation3], 128, 128, 8
    $region21: #{tpu_custom_call.1} parent=1 // pred_fallthru
      _
    // Predicated region
    $region22: #{tpu_custom_call.1} parent=1 // pred_check
      _
    $region23: #{tpu_custom_call.1} parent=1 // pred_check_branch
      %37 = sbr.rel (0) target = $region25
    $region24: #{tpu_custom_call.1} parent=1 // pred_region
      _
    $region25: #{tpu_custom_call.1} parent=1 // pred_fallthru
      _
    // Predicated region
    $region26: #{tpu_custom_call.1} parent=1 // pred_check
      _
    $region27: #{tpu_custom_call.1} parent=1 // pred_check_branch
      %39 = sbr.rel (0) target = $region29
    $region28: #{tpu_custom_call.1} parent=1 // pred_region
      _
    $region29: #{tpu_custom_call.1} parent=1 // pred_fallthru
      _
    // Predicated region
    $region30: #{tpu_custom_call.1} parent=1 // pred_check
      _
    $region31: #{tpu_custom_call.1} parent=1 // pred_check_branch
      %41 = sbr.rel (0) target = $region33
    $region32: #{tpu_custom_call.1} parent=1 // pred_region
      _
    $region33: #{tpu_custom_call.1} parent=1 // pred_fallthru
      _
    // Predicated region
    $region34: #{tpu_custom_call.1} parent=1 // pred_check
      _
    $region35: #{tpu_custom_call.1} parent=1 // pred_check_branch
      %43 = sbr.rel (0) target = $region37
    $region36: #{tpu_custom_call.1} parent=1 // pred_region
      _
    $region37: #{tpu_custom_call.1} parent=1 // pred_fallthru
      _
    // Predicated region
    $region38: #{tpu_custom_call.1} parent=1 // pred_check
      _
    $region39: #{tpu_custom_call.1} parent=1 // pred_check_branch
      %45 = sbr.rel (0) target = $region41
    $region40: #{tpu_custom_call.1} parent=1 // pred_region
      _
    $region41: #{tpu_custom_call.1} parent=1 // pred_fallthru
      _
    // Predicated region
    $region42: #{tpu_custom_call.1} parent=1 // pred_check
      _
    $region43: #{tpu_custom_call.1} parent=1 // pred_check_branch
      %47 = sbr.rel (0) target = $region45
    $region44: #{tpu_custom_call.1} parent=1 // pred_region
      %48 = dma.done [#allocation3], 1024
    $region45: #{tpu_custom_call.1} parent=1 // pred_fallthru
      _
    %v49 = vld [vmem:[%s0] sm:$0x1]
    %v50 = vld [vmem:[%s1] sm:$0xff]
    %v51 = vld [vmem:[%s1 + $0x8] sm:$0xff]
    %v52 = vld [vmem:[%s1 + $0x10] sm:$0xff]
    %v53 = vld [vmem:[%s1 + $0x18] sm:$0xff]
    %v54 = vld [vmem:[%s1 + $0x20] sm:$0xff]
    %vm55 = vcmask 326656
    %v57 = vsel %vm55, %v49, 0
    %59 = vmatprep.subr.mxu0 0.0
    %60 = vmatpush1.msra.mxu0 %v50
    %61 = vmatprep.subr.mxu0 0.0
    %62 = vmatpush1.msra.mxu0 %v51
    %63 = vmatprep.subr.mxu0 0.0
    %64 = vmatpush1.msra.mxu0 %v52
    %65 = vmatprep.subr.mxu0 0.0
    %66 = vmatpush1.msra.mxu0 %v53
    %67 = vmatprep.subr.mxu0 0.0
    %68 = vmatpush1.msra.mxu0 %v54
    %69 = vmatprep.subr.mxu0 0.0
    %70 = vmatpush1.msra.mxu0 0.0
    %71 = vmatprep.subr.mxu0 0.0
    %72 = vmatpush1.msra.mxu0 0.0
    %73 = vmatprep.subr.mxu0 0.0
    %74 = vmatpush1.msra.mxu0 0.0
    %75 = vmatprep.subr.mxu0 0.0
    %76 = vmatpush1.msra.mxu0 0.0
    %77 = vmatprep.subr.mxu0 0.0
    %78 = vmatpush1.msra.mxu0 0.0
    %79 = vmatprep.subr.mxu0 0.0
    %80 = vmatpush1.msra.mxu0 0.0
    %81 = vmatprep.subr.mxu0 0.0
    %82 = vmatpush1.msra.mxu0 0.0
    %83 = vmatprep.subr.mxu0 0.0
    %84 = vmatpush1.msra.mxu0 0.0
    %85 = vmatprep.subr.mxu0 0.0
    %86 = vmatpush1.msra.mxu0 0.0
    %87 = vmatprep.subr.mxu0 0.0
    %88 = vmatpush1.msra.mxu0 0.0
    %89 = vmatprep.subr.mxu0 0.0
    %90 = vmatpush1.msra.mxu0 0.0
    %91 = vmatprep.subr.mxu0 0.0
    %92 = vmatpush1.msra.mxu0 0.0
    %93 = vmatprep.subr.mxu0 0.0
    %94 = vmatpush1.msra.mxu0 0.0
    %95 = vmatprep.subr.mxu0 0.0
    %96 = vmatpush1.msra.mxu0 0.0
    %97 = vmatprep.subr.mxu0 0.0
    %98 = vmatpush1.msra.mxu0 0.0
    %99 = vmatprep.subr.mxu0 0.0
    %100 = vmatpush1.msra.mxu0 0.0
    %101 = vmatprep.subr.mxu0 0.0
    %102 = vmatpush1.msra.mxu0 0.0
    %103 = vmatprep.subr.mxu0 0.0
    %104 = vmatpush1.msra.mxu0 0.0
    %105 = vmatprep.subr.mxu0 0.0
    %106 = vmatpush1.msra.mxu0 0.0
    %107 = vmatprep.subr.mxu0 0.0
    %108 = vmatpush1.msra.mxu0 0.0
    %109 = vmatprep.subr.mxu0 0.0
    %110 = vmatpush1.msra.mxu0 0.0
    %111 = vmatprep.subr.mxu0 0.0
    %112 = vmatpush1.msra.mxu0 0.0
    %113 = vmatprep.subr.mxu0 0.0
    %114 = vmatpush1.msra.mxu0 0.0
    %115 = vmatprep.subr.mxu0 0.0
    %116 = vmatpush1.msra.mxu0 0.0
    %117 = vmatprep.subr.mxu0 0.0
    %118 = vmatpush1.msra.mxu0 0.0
    %119 = vmatprep.subr.mxu0 0.0
    %120 = vmatpush1.msra.mxu0 0.0
    %121 = vmatprep.subr.mxu0 0.0
    %122 = vmatpush1.msra.mxu0 0.0
    %123 = vmatprep.mubr.f32.mxu0 0.0
    %124 = vmatmul.mubr.f32.gmra.mrb[0].mxu0 %v57
    %v125 = vpop.f32.mrb[0].mxu0
    %v126 = vadd.f32 0.0, %v125
    %v127 = vpop.f32.mrb[0].mxu0
    %128 = vdwg.mxu0
    %v129 = vld [vmem:[%s3] sm:$0xff]
    %v130 = vld [vmem:[%s3 + $0x8] sm:$0xff]
    %v131 = vld [vmem:[%s3 + $0x10] sm:$0xff]
    %v132 = vld [vmem:[%s3 + $0x18] sm:$0xff]
    %vm133 = vcmask 261120
    %v135 = vsel %vm133, %v126, 0
    %137 = vmatprep.subr.mxu0 0.0
    %138 = vmatpush1.msra.mxu0 %v129
    %139 = vmatprep.subr.mxu0 0.0
    %140 = vmatpush1.msra.mxu0 %v130
    %141 = vmatprep.subr.mxu0 0.0
    %142 = vmatpush1.msra.mxu0 %v131
    %143 = vmatprep.subr.mxu0 0.0
    %144 = vmatpush1.msra.mxu0 %v132
    %145 = vmatprep.subr.mxu0 0.0
    %146 = vmatpush1.msra.mxu0 0.0
    %147 = vmatprep.subr.mxu0 0.0
    %148 = vmatpush1.msra.mxu0 0.0
    %149 = vmatprep.subr.mxu0 0.0
    %150 = vmatpush1.msra.mxu0 0.0
    %151 = vmatprep.subr.mxu0 0.0
    %152 = vmatpush1.msra.mxu0 0.0
    %153 = vmatprep.subr.mxu0 0.0
    %154 = vmatpush1.msra.mxu0 0.0
    %155 = vmatprep.subr.mxu0 0.0
    %156 = vmatpush1.msra.mxu0 0.0
    %157 = vmatprep.subr.mxu0 0.0
    %158 = vmatpush1.msra.mxu0 0.0
    %159 = vmatprep.subr.mxu0 0.0
    %160 = vmatpush1.msra.mxu0 0.0
    %161 = vmatprep.subr.mxu0 0.0
    %162 = vmatpush1.msra.mxu0 0.0
    %163 = vmatprep.subr.mxu0 0.0
    %164 = vmatpush1.msra.mxu0 0.0
    %165 = vmatprep.subr.mxu0 0.0
    %166 = vmatpush1.msra.mxu0 0.0
    %167 = vmatprep.subr.mxu0 0.0
    %168 = vmatpush1.msra.mxu0 0.0
    %169 = vmatprep.subr.mxu0 0.0
    %170 = vmatpush1.msra.mxu0 0.0
    %171 = vmatprep.subr.mxu0 0.0
    %172 = vmatpush1.msra.mxu0 0.0
    %173 = vmatprep.subr.mxu0 0.0
    %174 = vmatpush1.msra.mxu0 0.0
    %175 = vmatprep.subr.mxu0 0.0
    %176 = vmatpush1.msra.mxu0 0.0
    %177 = vmatprep.subr.mxu0 0.0
    %178 = vmatpush1.msra.mxu0 0.0
    %179 = vmatprep.subr.mxu0 0.0
    %180 = vmatpush1.msra.mxu0 0.0
    %181 = vmatprep.subr.mxu0 0.0
    %182 = vmatpush1.msra.mxu0 0.0
    %183 = vmatprep.subr.mxu0 0.0
    %184 = vmatpush1.msra.mxu0 0.0
    %185 = vmatprep.subr.mxu0 0.0
    %186 = vmatpush1.msra.mxu0 0.0
    %187 = vmatprep.subr.mxu0 0.0
    %188 = vmatpush1.msra.mxu0 0.0
    %189 = vmatprep.subr.mxu0 0.0
    %190 = vmatpush1.msra.mxu0 0.0
    %191 = vmatprep.subr.mxu0 0.0
    %192 = vmatpush1.msra.mxu0 0.0
    %193 = vmatprep.subr.mxu0 0.0
    %194 = vmatpush1.msra.mxu0 0.0
    %195 = vmatprep.subr.mxu0 0.0
    %196 = vmatpush1.msra.mxu0 0.0
    %197 = vmatprep.subr.mxu0 0.0
    %198 = vmatpush1.msra.mxu0 0.0
    %199 = vmatprep.subr.mxu0 0.0
    %200 = vmatpush1.msra.mxu0 0.0
    %201 = vmatprep.mubr.f32.mxu0 0.0
    %202 = vmatmul.mubr.f32.gmra.mrb[0].mxu0 %v135
    %v203 = vpop.f32.mrb[0].mxu0
    %v204 = vadd.f32 0.0, %v203
    %v205 = vpop.f32.mrb[0].mxu0
    %206 = vdwg.mxu0
    %v207 = vld [vmem:[%s2] sm:$0xff]
    %v208 = vld [vmem:[%s2 + $0x8] sm:$0xff]
    %v209 = vld [vmem:[%s2 + $0x10] sm:$0xff]
    %v210 = vld [vmem:[%s2 + $0x18] sm:$0xff]
    %v211 = vld [vmem:[%s2 + $0x20] sm:$0xff]
    %v212 = vld [vmem:[%s2 + $0x28] sm:$0xff]
    %v213 = vld [vmem:[%s2 + $0x30] sm:$0xff]
    %v214 = vld [vmem:[%s2 + $0x38] sm:$0xff]
    %v215 = vld [vmem:[%s2 + $0x40] sm:$0xff]
    %v216 = vld [vmem:[%s2 + $0x48] sm:$0xff]
    %v217 = vld [vmem:[%s2 + $0x50] sm:$0xff]
    %v218 = vld [vmem:[%s2 + $0x58] sm:$0xff]
    %v219 = vld [vmem:[%s2 + $0x60] sm:$0xff]
    %v220 = vld [vmem:[%s2 + $0x68] sm:$0x1]
    %v221 = vld [vmem:[#allocation2] sm:$0xff]
    %v222 = vld [vmem:[#allocation2 + $0x8] sm:$0xff]
    %v223 = vld [vmem:[#allocation2 + $0x10] sm:$0xff]
    %v224 = vld [vmem:[#allocation2 + $0x18] sm:$0xff]
    %v225 = vld [vmem:[#allocation2 + $0x20] sm:$0xff]
    %v226 = vld [vmem:[#allocation2 + $0x28] sm:$0xff]
    %v227 = vld [vmem:[#allocation2 + $0x30] sm:$0xff]
    %v228 = vld [vmem:[#allocation2 + $0x38] sm:$0xff]
    %vm229 = vcmask 523264
    %v231 = vsel %vm229, %v207, 0
    %v234 = vsel %vm229, %v208, 0
    %v237 = vsel %vm229, %v209, 0
    %v240 = vsel %vm229, %v210, 0
    %v243 = vsel %vm229, %v211, 0
    %v246 = vsel %vm229, %v212, 0
    %v249 = vsel %vm229, %v213, 0
    %v252 = vsel %vm229, %v214, 0
    %v255 = vsel %vm229, %v215, 0
    %v258 = vsel %vm229, %v216, 0
    %v261 = vsel %vm229, %v217, 0
    %v264 = vsel %vm229, %v218, 0
    %v267 = vsel %vm229, %v219, 0
    %v270 = vsel %vm229, %v220, 0
    %272 = vmatprep.subr.mxu0 0.0
    %273 = vmatpush1.msra.mxu0 %v221
    %274 = vmatprep.subr.mxu0 0.0
    %275 = vmatpush1.msra.mxu0 %v222
    %276 = vmatprep.subr.mxu0 0.0
    %277 = vmatpush1.msra.mxu0 %v223
    %278 = vmatprep.subr.mxu0 0.0
    %279 = vmatpush1.msra.mxu0 %v224
    %280 = vmatprep.subr.mxu0 0.0
    %281 = vmatpush1.msra.mxu0 %v225
    %282 = vmatprep.subr.mxu0 0.0
    %283 = vmatpush1.msra.mxu0 %v226
    %284 = vmatprep.subr.mxu0 0.0
    %285 = vmatpush1.msra.mxu0 %v227
    %286 = vmatprep.subr.mxu0 0.0
    %287 = vmatpush1.msra.mxu0 %v228
    %288 = vmatprep.subr.mxu0 0.0
    %289 = vmatpush1.msra.mxu0 0.0
    %290 = vmatprep.subr.mxu0 0.0
    %291 = vmatpush1.msra.mxu0 0.0
    %292 = vmatprep.subr.mxu0 0.0
    %293 = vmatpush1.msra.mxu0 0.0
    %294 = vmatprep.subr.mxu0 0.0
    %295 = vmatpush1.msra.mxu0 0.0
    %296 = vmatprep.subr.mxu0 0.0
    %297 = vmatpush1.msra.mxu0 0.0
    %298 = vmatprep.subr.mxu0 0.0
    %299 = vmatpush1.msra.mxu0 0.0
    %300 = vmatprep.subr.mxu0 0.0
    %301 = vmatpush1.msra.mxu0 0.0
    %302 = vmatprep.subr.mxu0 0.0
    %303 = vmatpush1.msra.mxu0 0.0
    %304 = vmatprep.subr.mxu0 0.0
    %305 = vmatpush1.msra.mxu0 0.0
    %306 = vmatprep.subr.mxu0 0.0
    %307 = vmatpush1.msra.mxu0 0.0
    %308 = vmatprep.subr.mxu0 0.0
    %309 = vmatpush1.msra.mxu0 0.0
    %310 = vmatprep.subr.mxu0 0.0
    %311 = vmatpush1.msra.mxu0 0.0
    %312 = vmatprep.subr.mxu0 0.0
    %313 = vmatpush1.msra.mxu0 0.0
    %314 = vmatprep.subr.mxu0 0.0
    %315 = vmatpush1.msra.mxu0 0.0
    %316 = vmatprep.subr.mxu0 0.0
    %317 = vmatpush1.msra.mxu0 0.0
    %318 = vmatprep.subr.mxu0 0.0
    %319 = vmatpush1.msra.mxu0 0.0
    %320 = vmatprep.subr.mxu0 0.0
    %321 = vmatpush1.msra.mxu0 0.0
    %322 = vmatprep.subr.mxu0 0.0
    %323 = vmatpush1.msra.mxu0 0.0
    %324 = vmatprep.subr.mxu0 0.0
    %325 = vmatpush1.msra.mxu0 0.0
    %326 = vmatprep.subr.mxu0 0.0
    %327 = vmatpush1.msra.mxu0 0.0
    %328 = vmatprep.subr.mxu0 0.0
    %329 = vmatpush1.msra.mxu0 0.0
    %330 = vmatprep.subr.mxu0 0.0
    %331 = vmatpush1.msra.mxu0 0.0
    %332 = vmatprep.subr.mxu0 0.0
    %333 = vmatpush1.msra.mxu0 0.0
    %334 = vmatprep.subr.mxu0 0.0
    %335 = vmatpush1.msra.mxu0 0.0
    %336 = vmatprep.mubr.f32.mxu0 0.0
    %337 = vmatmul.mubr.f32.gmra.mrb[0].mxu0 %v231
    %v338 = vpop.f32.mrb[0].mxu0
    %v339 = vadd.f32 0.0, %v338
    %v340 = vpop.f32.mrb[0].mxu0
    %341 = vmatprep.mubr.f32.mxu0 0.0
    %342 = vmatmul.mubr.f32.gmra.mrb[0].mxu0 %v234
    %v343 = vpop.f32.mrb[0].mxu0
    %v344 = vadd.f32 0.0, %v343
    %v345 = vpop.f32.mrb[0].mxu0
    %346 = vmatprep.mubr.f32.mxu0 0.0
    %347 = vmatmul.mubr.f32.gmra.mrb[0].mxu0 %v237
    %v348 = vpop.f32.mrb[0].mxu0
    %v349 = vadd.f32 0.0, %v348
    %v350 = vpop.f32.mrb[0].mxu0
    %351 = vmatprep.mubr.f32.mxu0 0.0
    %352 = vmatmul.mubr.f32.gmra.mrb[0].mxu0 %v240
    %v353 = vpop.f32.mrb[0].mxu0
    %v354 = vadd.f32 0.0, %v353
    %v355 = vpop.f32.mrb[0].mxu0
    %356 = vmatprep.mubr.f32.mxu0 0.0
    %357 = vmatmul.mubr.f32.gmra.mrb[0].mxu0 %v243
    %v358 = vpop.f32.mrb[0].mxu0
    %v359 = vadd.f32 0.0, %v358
    %v360 = vpop.f32.mrb[0].mxu0
    %361 = vmatprep.mubr.f32.mxu0 0.0
    %362 = vmatmul.mubr.f32.gmra.mrb[0].mxu0 %v246
    %v363 = vpop.f32.mrb[0].mxu0
    %v364 = vadd.f32 0.0, %v363
    %v365 = vpop.f32.mrb[0].mxu0
    %366 = vmatprep.mubr.f32.mxu0 0.0
    %367 = vmatmul.mubr.f32.gmra.mrb[0].mxu0 %v249
    %v368 = vpop.f32.mrb[0].mxu0
    %v369 = vadd.f32 0.0, %v368
    %v370 = vpop.f32.mrb[0].mxu0
    %371 = vmatprep.mubr.f32.mxu0 0.0
    %372 = vmatmul.mubr.f32.gmra.mrb[0].mxu0 %v252
    %v373 = vpop.f32.mrb[0].mxu0
    %v374 = vadd.f32 0.0, %v373
    %v375 = vpop.f32.mrb[0].mxu0
    %376 = vmatprep.mubr.f32.mxu0 0.0
    %377 = vmatmul.mubr.f32.gmra.mrb[0].mxu0 %v255
    %v378 = vpop.f32.mrb[0].mxu0
    %v379 = vadd.f32 0.0, %v378
    %v380 = vpop.f32.mrb[0].mxu0
    %381 = vmatprep.mubr.f32.mxu0 0.0
    %382 = vmatmul.mubr.f32.gmra.mrb[0].mxu0 %v258
    %v383 = vpop.f32.mrb[0].mxu0
    %v384 = vadd.f32 0.0, %v383
    %v385 = vpop.f32.mrb[0].mxu0
    %386 = vmatprep.mubr.f32.mxu0 0.0
    %387 = vmatmul.mubr.f32.gmra.mrb[0].mxu0 %v261
    %v388 = vpop.f32.mrb[0].mxu0
    %v389 = vadd.f32 0.0, %v388
    %v390 = vpop.f32.mrb[0].mxu0
    %391 = vmatprep.mubr.f32.mxu0 0.0
    %392 = vmatmul.mubr.f32.gmra.mrb[0].mxu0 %v264
    %v393 = vpop.f32.mrb[0].mxu0
    %v394 = vadd.f32 0.0, %v393
    %v395 = vpop.f32.mrb[0].mxu0
    %396 = vmatprep.mubr.f32.mxu0 0.0
    %397 = vmatmul.mubr.f32.gmra.mrb[0].mxu0 %v267
    %v398 = vpop.f32.mrb[0].mxu0
    %v399 = vadd.f32 0.0, %v398
    %v400 = vpop.f32.mrb[0].mxu0
    %401 = vmatprep.mubr.f32.mxu0 0.0
    %402 = vmatmul.mubr.f32.gmra.mrb[0].mxu0 %v270
    %v403 = vpop.f32.mrb[0].mxu0
    %v404 = vadd.f32 0.0, %v403
    %v405 = vpop.f32.mrb[0].mxu0
    %406 = vdwg.mxu0
    %v407 = vlaneseq
    %v408 = vshrl.u32 %v407, 7
    %v409 = vsub.s32 0, %v408
    %v410 = vrot.slane %v204, %v409
    %v411 = vadd.f32 %v410, %v339
    %v412 = vadd.f32 %v410, %v344
    %v413 = vadd.f32 %v410, %v349
    %v414 = vadd.f32 %v410, %v354
    %v415 = vadd.f32 %v410, %v359
    %v416 = vadd.f32 %v410, %v364
    %v417 = vadd.f32 %v410, %v369
    %v418 = vadd.f32 %v410, %v374
    %v419 = vadd.f32 %v410, %v379
    %v420 = vadd.f32 %v410, %v384
    %v421 = vadd.f32 %v410, %v389
    %v422 = vadd.f32 %v410, %v394
    %v423 = vadd.f32 %v410, %v399
    %v424 = vadd.f32 %v410, %v404
    %v425 = vld [vmem:[%s5] sm:$0x1]
    %v427 = vlaneseq
    %v428 = vshrl.u32 %v427, 7
    %v429 = vsub.s32 0, %v428
    %v430 = vrot.slane %v425, %v429
    %v432 = vadd.f32 %v411, %v430
    %v433 = vadd.f32 %v412, %v430
    %v434 = vadd.f32 %v413, %v430
    %v435 = vadd.f32 %v414, %v430
    %v436 = vadd.f32 %v415, %v430
    %v437 = vadd.f32 %v416, %v430
    %v438 = vadd.f32 %v417, %v430
    %v439 = vadd.f32 %v418, %v430
    %v440 = vadd.f32 %v419, %v430
    %v441 = vadd.f32 %v420, %v430
    %v442 = vadd.f32 %v421, %v430
    %v443 = vadd.f32 %v422, %v430
    %v444 = vadd.f32 %v423, %v430
    %v445 = vadd.f32 %v424, %v430
    %v446 = vmax.f32 %v432, 0.0
    %v447 = vmax.f32 %v433, 0.0
    %v448 = vmax.f32 %v434, 0.0
    %v449 = vmax.f32 %v435, 0.0
    %v450 = vmax.f32 %v436, 0.0
    %v451 = vmax.f32 %v437, 0.0
    %v452 = vmax.f32 %v438, 0.0
    %v453 = vmax.f32 %v439, 0.0
    %v454 = vmax.f32 %v440, 0.0
    %v455 = vmax.f32 %v441, 0.0
    %v456 = vmax.f32 %v442, 0.0
    %v457 = vmax.f32 %v443, 0.0
    %v458 = vmax.f32 %v444, 0.0
    %v459 = vmax.f32 %v445, 0.0
    %v460 = vld [vmem:[%s6] sm:$0xff]
    %v461 = vld [vmem:[%s6 + $0x8] sm:$0xff]
    %v462 = vld [vmem:[%s6 + $0x10] sm:$0xff]
    %v463 = vld [vmem:[%s6 + $0x18] sm:$0xff]
    %v464 = vld [vmem:[%s6 + $0x20] sm:$0xff]
    %v465 = vld [vmem:[%s6 + $0x28] sm:$0xff]
    %v466 = vld [vmem:[%s6 + $0x30] sm:$0xff]
    %v467 = vld [vmem:[%s6 + $0x38] sm:$0xff]
    %v468 = vld [vmem:[%s6 + $0x40] sm:$0xff]
    %v469 = vld [vmem:[%s6 + $0x48] sm:$0xff]
    %v470 = vld [vmem:[%s6 + $0x50] sm:$0xff]
    %v471 = vld [vmem:[%s6 + $0x58] sm:$0xff]
    %v472 = vld [vmem:[%s6 + $0x60] sm:$0xf]
    %v473 = vld [vmem:[%s7] sm:$0x1]
    %v475 = vlaneseq
    %v476 = vshrl.u32 %v475, 7
    %v477 = vsub.s32 0, %v476
    %v478 = vrot.slane %v473, %v477
    %vm480 = vcmask 818176
    %v482 = vsel %vm480, %v446, 0
    %v485 = vsel %vm480, %v447, 0
    %v488 = vsel %vm480, %v448, 0
    %v491 = vsel %vm480, %v449, 0
    %v494 = vsel %vm480, %v450, 0
    %v497 = vsel %vm480, %v451, 0
    %v500 = vsel %vm480, %v452, 0
    %v503 = vsel %vm480, %v453, 0
    %v506 = vsel %vm480, %v454, 0
    %v509 = vsel %vm480, %v455, 0
    %v512 = vsel %vm480, %v456, 0
    %v515 = vsel %vm480, %v457, 0
    %v518 = vsel %vm480, %v458, 0
    %v521 = vsel %vm480, %v459, 0
    %vm523 = vcmask 1043456
    %v525 = vsel %vm523, %v472, 0
    %527 = vmatprep.subr.mxu0 0.0
    %528 = vmatpush1.msra.mxu0 %v460
    %529 = vmatprep.subr.mxu0 0.0
    %530 = vmatpush1.msra.mxu0 %v461
    %531 = vmatprep.subr.mxu0 0.0
    %532 = vmatpush1.msra.mxu0 %v462
    %533 = vmatprep.subr.mxu0 0.0
    %534 = vmatpush1.msra.mxu0 %v463
    %535 = vmatprep.subr.mxu0 0.0
    %536 = vmatpush1.msra.mxu0 %v464
    %537 = vmatprep.subr.mxu0 0.0
    %538 = vmatpush1.msra.mxu0 %v465
    %539 = vmatprep.subr.mxu0 0.0
    %540 = vmatpush1.msra.mxu0 %v466
    %541 = vmatprep.subr.mxu0 0.0
    %542 = vmatpush1.msra.mxu0 %v467
    %543 = vmatprep.subr.mxu0 0.0
    %544 = vmatpush1.msra.mxu0 %v468
    %545 = vmatprep.subr.mxu0 0.0
    %546 = vmatpush1.msra.mxu0 %v469
    %547 = vmatprep.subr.mxu0 0.0
    %548 = vmatpush1.msra.mxu0 %v470
    %549 = vmatprep.subr.mxu0 0.0
    %550 = vmatpush1.msra.mxu0 %v471
    %551 = vmatprep.subr.mxu0 0.0
    %552 = vmatpush1.msra.mxu0 %v525
    %553 = vmatprep.subr.mxu0 0.0
    %554 = vmatpush1.msra.mxu0 0.0
    %555 = vmatprep.subr.mxu0 0.0
    %556 = vmatpush1.msra.mxu0 0.0
    %557 = vmatprep.subr.mxu0 0.0
    %558 = vmatpush1.msra.mxu0 0.0
    %559 = vmatprep.subr.mxu0 0.0
    %560 = vmatpush1.msra.mxu0 0.0
    %561 = vmatprep.subr.mxu0 0.0
    %562 = vmatpush1.msra.mxu0 0.0
    %563 = vmatprep.subr.mxu0 0.0
    %564 = vmatpush1.msra.mxu0 0.0
    %565 = vmatprep.subr.mxu0 0.0
    %566 = vmatpush1.msra.mxu0 0.0
    %567 = vmatprep.subr.mxu0 0.0
    %568 = vmatpush1.msra.mxu0 0.0
    %569 = vmatprep.subr.mxu0 0.0
    %570 = vmatpush1.msra.mxu0 0.0
    %571 = vmatprep.subr.mxu0 0.0
    %572 = vmatpush1.msra.mxu0 0.0
    %573 = vmatprep.subr.mxu0 0.0
    %574 = vmatpush1.msra.mxu0 0.0
    %575 = vmatprep.subr.mxu0 0.0
    %576 = vmatpush1.msra.mxu0 0.0
    %577 = vmatprep.subr.mxu0 0.0
    %578 = vmatpush1.msra.mxu0 0.0
    %579 = vmatprep.subr.mxu0 0.0
    %580 = vmatpush1.msra.mxu0 0.0
    %581 = vmatprep.subr.mxu0 0.0
    %582 = vmatpush1.msra.mxu0 0.0
    %583 = vmatprep.subr.mxu0 0.0
    %584 = vmatpush1.msra.mxu0 0.0
    %585 = vmatprep.subr.mxu0 0.0
    %586 = vmatpush1.msra.mxu0 0.0
    %587 = vmatprep.subr.mxu0 0.0
    %588 = vmatpush1.msra.mxu0 0.0
    %589 = vmatprep.subr.mxu0 0.0
    %590 = vmatpush1.msra.mxu0 0.0
    %591 = vmatprep.mubr.f32.mxu0 0.0
    %592 = vmatmul.mubr.f32.gmra.mrb[0].mxu0 %v482
    %v593 = vpop.f32.mrb[0].mxu0
    %v594 = vadd.f32 %v478, %v593
    %v595 = vpop.f32.mrb[0].mxu0
    %596 = vmatprep.mubr.f32.mxu0 0.0
    %597 = vmatmul.mubr.f32.gmra.mrb[0].mxu0 %v485
    %v598 = vpop.f32.mrb[0].mxu0
    %v599 = vadd.f32 %v478, %v598
    %v600 = vpop.f32.mrb[0].mxu0
    %601 = vmatprep.mubr.f32.mxu0 0.0
    %602 = vmatmul.mubr.f32.gmra.mrb[0].mxu0 %v488
    %v603 = vpop.f32.mrb[0].mxu0
    %v604 = vadd.f32 %v478, %v603
    %v605 = vpop.f32.mrb[0].mxu0
    %606 = vmatprep.mubr.f32.mxu0 0.0
    %607 = vmatmul.mubr.f32.gmra.mrb[0].mxu0 %v491
    %v608 = vpop.f32.mrb[0].mxu0
    %v609 = vadd.f32 %v478, %v608
    %v610 = vpop.f32.mrb[0].mxu0
    %611 = vmatprep.mubr.f32.mxu0 0.0
    %612 = vmatmul.mubr.f32.gmra.mrb[0].mxu0 %v494
    %v613 = vpop.f32.mrb[0].mxu0
    %v614 = vadd.f32 %v478, %v613
    %v615 = vpop.f32.mrb[0].mxu0
    %616 = vmatprep.mubr.f32.mxu0 0.0
    %617 = vmatmul.mubr.f32.gmra.mrb[0].mxu0 %v497
    %v618 = vpop.f32.mrb[0].mxu0
    %v619 = vadd.f32 %v478, %v618
    %v620 = vpop.f32.mrb[0].mxu0
    %621 = vmatprep.mubr.f32.mxu0 0.0
    %622 = vmatmul.mubr.f32.gmra.mrb[0].mxu0 %v500
    %v623 = vpop.f32.mrb[0].mxu0
    %v624 = vadd.f32 %v478, %v623
    %v625 = vpop.f32.mrb[0].mxu0
    %626 = vmatprep.mubr.f32.mxu0 0.0
    %627 = vmatmul.mubr.f32.gmra.mrb[0].mxu0 %v503
    %v628 = vpop.f32.mrb[0].mxu0
    %v629 = vadd.f32 %v478, %v628
    %v630 = vpop.f32.mrb[0].mxu0
    %631 = vmatprep.mubr.f32.mxu0 0.0
    %632 = vmatmul.mubr.f32.gmra.mrb[0].mxu0 %v506
    %v633 = vpop.f32.mrb[0].mxu0
    %v634 = vadd.f32 %v478, %v633
    %v635 = vpop.f32.mrb[0].mxu0
    %636 = vmatprep.mubr.f32.mxu0 0.0
    %637 = vmatmul.mubr.f32.gmra.mrb[0].mxu0 %v509
    %v638 = vpop.f32.mrb[0].mxu0
    %v639 = vadd.f32 %v478, %v638
    %v640 = vpop.f32.mrb[0].mxu0
    %641 = vmatprep.mubr.f32.mxu0 0.0
    %642 = vmatmul.mubr.f32.gmra.mrb[0].mxu0 %v512
    %v643 = vpop.f32.mrb[0].mxu0
    %v644 = vadd.f32 %v478, %v643
    %v645 = vpop.f32.mrb[0].mxu0
    %646 = vmatprep.mubr.f32.mxu0 0.0
    %647 = vmatmul.mubr.f32.gmra.mrb[0].mxu0 %v515
    %v648 = vpop.f32.mrb[0].mxu0
    %v649 = vadd.f32 %v478, %v648
    %v650 = vpop.f32.mrb[0].mxu0
    %651 = vmatprep.mubr.f32.mxu0 0.0
    %652 = vmatmul.mubr.f32.gmra.mrb[0].mxu0 %v518
    %v653 = vpop.f32.mrb[0].mxu0
    %v654 = vadd.f32 %v478, %v653
    %v655 = vpop.f32.mrb[0].mxu0
    %656 = vmatprep.mubr.f32.mxu0 0.0
    %657 = vmatmul.mubr.f32.gmra.mrb[0].mxu0 %v521
    %v658 = vpop.f32.mrb[0].mxu0
    %v659 = vadd.f32 %v478, %v658
    %v660 = vpop.f32.mrb[0].mxu0
    %661 = vdwg.mxu0
    %v662 = vmax.f32 %v594, 0.0
    %v663 = vmax.f32 %v599, 0.0
    %v664 = vmax.f32 %v604, 0.0
    %v665 = vmax.f32 %v609, 0.0
    %v666 = vmax.f32 %v614, 0.0
    %v667 = vmax.f32 %v619, 0.0
    %v668 = vmax.f32 %v624, 0.0
    %v669 = vmax.f32 %v629, 0.0
    %v670 = vmax.f32 %v634, 0.0
    %v671 = vmax.f32 %v639, 0.0
    %v672 = vmax.f32 %v644, 0.0
    %v673 = vmax.f32 %v649, 0.0
    %v674 = vmax.f32 %v654, 0.0
    %v675 = vmax.f32 %v659, 0.0
    %v676 = vld [vmem:[%s8] sm:$0xff]
    %v677 = vld [vmem:[%s8 + $0x8] sm:$0xff]
    %v678 = vld [vmem:[%s8 + $0x10] sm:$0xff]
    %v679 = vld [vmem:[%s8 + $0x18] sm:$0xff]
    %v680 = vld [vmem:[%s8 + $0x20] sm:$0xff]
    %v681 = vld [vmem:[%s8 + $0x28] sm:$0xff]
    %v682 = vld [vmem:[%s8 + $0x30] sm:$0xff]
    %v683 = vld [vmem:[%s8 + $0x38] sm:$0xff]
    %v684 = vld [vmem:[%s8 + $0x40] sm:$0xff]
    %v685 = vld [vmem:[%s8 + $0x48] sm:$0xff]
    %v686 = vld [vmem:[%s8 + $0x50] sm:$0xff]
    %v687 = vld [vmem:[%s8 + $0x58] sm:$0xff]
    %v688 = vld [vmem:[%s8 + $0x60] sm:$0xf]
    %v689 = vld [vmem:[%s9] sm:$0x1]
    %v691 = vlaneseq
    %v692 = vshrl.u32 %v691, 7
    %v693 = vsub.s32 0, %v692
    %v694 = vrot.slane %v689, %v693
    %v697 = vsel %vm480, %v662, 0
    %v700 = vsel %vm480, %v663, 0
    %v703 = vsel %vm480, %v664, 0
    %v706 = vsel %vm480, %v665, 0
    %v709 = vsel %vm480, %v666, 0
    %v712 = vsel %vm480, %v667, 0
    %v715 = vsel %vm480, %v668, 0
    %v718 = vsel %vm480, %v669, 0
    %v721 = vsel %vm480, %v670, 0
    %v724 = vsel %vm480, %v671, 0
    %v727 = vsel %vm480, %v672, 0
    %v730 = vsel %vm480, %v673, 0
    %v733 = vsel %vm480, %v674, 0
    %v736 = vsel %vm480, %v675, 0
    %v739 = vsel %vm523, %v688, 0
    %741 = vmatprep.subr.mxu0 0.0
    %742 = vmatpush1.msra.mxu0 %v676
    %743 = vmatprep.subr.mxu0 0.0
    %744 = vmatpush1.msra.mxu0 %v677
    %745 = vmatprep.subr.mxu0 0.0
    %746 = vmatpush1.msra.mxu0 %v678
    %747 = vmatprep.subr.mxu0 0.0
    %748 = vmatpush1.msra.mxu0 %v679
    %749 = vmatprep.subr.mxu0 0.0
    %750 = vmatpush1.msra.mxu0 %v680
    %751 = vmatprep.subr.mxu0 0.0
    %752 = vmatpush1.msra.mxu0 %v681
    %753 = vmatprep.subr.mxu0 0.0
    %754 = vmatpush1.msra.mxu0 %v682
    %755 = vmatprep.subr.mxu0 0.0
    %756 = vmatpush1.msra.mxu0 %v683
    %757 = vmatprep.subr.mxu0 0.0
    %758 = vmatpush1.msra.mxu0 %v684
    %759 = vmatprep.subr.mxu0 0.0
    %760 = vmatpush1.msra.mxu0 %v685
    %761 = vmatprep.subr.mxu0 0.0
    %762 = vmatpush1.msra.mxu0 %v686
    %763 = vmatprep.subr.mxu0 0.0
    %764 = vmatpush1.msra.mxu0 %v687
    %765 = vmatprep.subr.mxu0 0.0
    %766 = vmatpush1.msra.mxu0 %v739
    %767 = vmatprep.subr.mxu0 0.0
    %768 = vmatpush1.msra.mxu0 0.0
    %769 = vmatprep.subr.mxu0 0.0
    %770 = vmatpush1.msra.mxu0 0.0
    %771 = vmatprep.subr.mxu0 0.0
    %772 = vmatpush1.msra.mxu0 0.0
    %773 = vmatprep.subr.mxu0 0.0
    %774 = vmatpush1.msra.mxu0 0.0
    %775 = vmatprep.subr.mxu0 0.0
    %776 = vmatpush1.msra.mxu0 0.0
    %777 = vmatprep.subr.mxu0 0.0
    %778 = vmatpush1.msra.mxu0 0.0
    %779 = vmatprep.subr.mxu0 0.0
    %780 = vmatpush1.msra.mxu0 0.0
    %781 = vmatprep.subr.mxu0 0.0
    %782 = vmatpush1.msra.mxu0 0.0
    %783 = vmatprep.subr.mxu0 0.0
    %784 = vmatpush1.msra.mxu0 0.0
    %785 = vmatprep.subr.mxu0 0.0
    %786 = vmatpush1.msra.mxu0 0.0
    %787 = vmatprep.subr.mxu0 0.0
    %788 = vmatpush1.msra.mxu0 0.0
    %789 = vmatprep.subr.mxu0 0.0
    %790 = vmatpush1.msra.mxu0 0.0
    %791 = vmatprep.subr.mxu0 0.0
    %792 = vmatpush1.msra.mxu0 0.0
    %793 = vmatprep.subr.mxu0 0.0
    %794 = vmatpush1.msra.mxu0 0.0
    %795 = vmatprep.subr.mxu0 0.0
    %796 = vmatpush1.msra.mxu0 0.0
    %797 = vmatprep.subr.mxu0 0.0
    %798 = vmatpush1.msra.mxu0 0.0
    %799 = vmatprep.subr.mxu0 0.0
    %800 = vmatpush1.msra.mxu0 0.0
    %801 = vmatprep.subr.mxu0 0.0
    %802 = vmatpush1.msra.mxu0 0.0
    %803 = vmatprep.subr.mxu0 0.0
    %804 = vmatpush1.msra.mxu0 0.0
    %805 = vmatprep.mubr.f32.mxu0 0.0
    %806 = vmatmul.mubr.f32.gmra.mrb[0].mxu0 %v697
    %v807 = vpop.f32.mrb[0].mxu0
    %v808 = vadd.f32 %v694, %v807
    %v809 = vpop.f32.mrb[0].mxu0
    %810 = vmatprep.mubr.f32.mxu0 0.0
    %811 = vmatmul.mubr.f32.gmra.mrb[0].mxu0 %v700
    %v812 = vpop.f32.mrb[0].mxu0
    %v813 = vadd.f32 %v694, %v812
    %v814 = vpop.f32.mrb[0].mxu0
    %815 = vmatprep.mubr.f32.mxu0 0.0
    %816 = vmatmul.mubr.f32.gmra.mrb[0].mxu0 %v703
    %v817 = vpop.f32.mrb[0].mxu0
    %v818 = vadd.f32 %v694, %v817
    %v819 = vpop.f32.mrb[0].mxu0
    %820 = vmatprep.mubr.f32.mxu0 0.0
    %821 = vmatmul.mubr.f32.gmra.mrb[0].mxu0 %v706
    %v822 = vpop.f32.mrb[0].mxu0
    %v823 = vadd.f32 %v694, %v822
    %v824 = vpop.f32.mrb[0].mxu0
    %825 = vmatprep.mubr.f32.mxu0 0.0
    %826 = vmatmul.mubr.f32.gmra.mrb[0].mxu0 %v709
    %v827 = vpop.f32.mrb[0].mxu0
    %v828 = vadd.f32 %v694, %v827
    %v829 = vpop.f32.mrb[0].mxu0
    %830 = vmatprep.mubr.f32.mxu0 0.0
    %831 = vmatmul.mubr.f32.gmra.mrb[0].mxu0 %v712
    %v832 = vpop.f32.mrb[0].mxu0
    %v833 = vadd.f32 %v694, %v832
    %v834 = vpop.f32.mrb[0].mxu0
    %835 = vmatprep.mubr.f32.mxu0 0.0
    %836 = vmatmul.mubr.f32.gmra.mrb[0].mxu0 %v715
    %v837 = vpop.f32.mrb[0].mxu0
    %v838 = vadd.f32 %v694, %v837
    %v839 = vpop.f32.mrb[0].mxu0
    %840 = vmatprep.mubr.f32.mxu0 0.0
    %841 = vmatmul.mubr.f32.gmra.mrb[0].mxu0 %v718
    %v842 = vpop.f32.mrb[0].mxu0
    %v843 = vadd.f32 %v694, %v842
    %v844 = vpop.f32.mrb[0].mxu0
    %845 = vmatprep.mubr.f32.mxu0 0.0
    %846 = vmatmul.mubr.f32.gmra.mrb[0].mxu0 %v721
    %v847 = vpop.f32.mrb[0].mxu0
    %v848 = vadd.f32 %v694, %v847
    %v849 = vpop.f32.mrb[0].mxu0
    %850 = vmatprep.mubr.f32.mxu0 0.0
    %851 = vmatmul.mubr.f32.gmra.mrb[0].mxu0 %v724
    %v852 = vpop.f32.mrb[0].mxu0
    %v853 = vadd.f32 %v694, %v852
    %v854 = vpop.f32.mrb[0].mxu0
    %855 = vmatprep.mubr.f32.mxu0 0.0
    %856 = vmatmul.mubr.f32.gmra.mrb[0].mxu0 %v727
    %v857 = vpop.f32.mrb[0].mxu0
    %v858 = vadd.f32 %v694, %v857
    %v859 = vpop.f32.mrb[0].mxu0
    %860 = vmatprep.mubr.f32.mxu0 0.0
    %861 = vmatmul.mubr.f32.gmra.mrb[0].mxu0 %v730
    %v862 = vpop.f32.mrb[0].mxu0
    %v863 = vadd.f32 %v694, %v862
    %v864 = vpop.f32.mrb[0].mxu0
    %865 = vmatprep.mubr.f32.mxu0 0.0
    %866 = vmatmul.mubr.f32.gmra.mrb[0].mxu0 %v733
    %v867 = vpop.f32.mrb[0].mxu0
    %v868 = vadd.f32 %v694, %v867
    %v869 = vpop.f32.mrb[0].mxu0
    %870 = vmatprep.mubr.f32.mxu0 0.0
    %871 = vmatmul.mubr.f32.gmra.mrb[0].mxu0 %v736
    %v872 = vpop.f32.mrb[0].mxu0
    %v873 = vadd.f32 %v694, %v872
    %v874 = vpop.f32.mrb[0].mxu0
    %875 = vdwg.mxu0
    %v876 = vpack.c.bf16 %v813, %v808
    %v877 = vpack.c.bf16 %v823, %v818
    %v878 = vpack.c.bf16 %v833, %v828
    %v879 = vpack.c.bf16 %v843, %v838
    %v880 = vpack.c.bf16 %v853, %v848
    %v881 = vpack.c.bf16 %v863, %v858
    %v882 = vpack.c.bf16 %v873, %v868
    %v890 = vunpack.c.l.b16 %v876
    %v891 = vunpack.c.h.b16 %v876
    %v892 = vunpack.c.l.b16 %v877
    %v893 = vunpack.c.h.b16 %v877
    %v894 = vunpack.c.l.b16 %v878
    %v895 = vunpack.c.h.b16 %v878
    %v896 = vunpack.c.l.b16 %v879
    %v897 = vunpack.c.h.b16 %v879
    %v898 = vunpack.c.l.b16 %v880
    %v899 = vunpack.c.h.b16 %v880
    %v900 = vunpack.c.l.b16 %v881
    %v901 = vunpack.c.h.b16 %v881
    %v902 = vunpack.c.l.b16 %v882
    %v903 = vunpack.c.h.b16 %v882
    %v904 = vpack.c.b16 %v890, %v890
    %v905 = vpack.c.b16 %v891, %v891
    %v906 = vpack.c.b16 %v892, %v892
    %v907 = vpack.c.b16 %v893, %v893
    %v908 = vpack.c.b16 %v894, %v894
    %v909 = vpack.c.b16 %v895, %v895
    %v910 = vpack.c.b16 %v896, %v896
    %v911 = vpack.c.b16 %v897, %v897
    %v912 = vpack.c.b16 %v898, %v898
    %v913 = vpack.c.b16 %v899, %v899
    %v914 = vpack.c.b16 %v900, %v900
    %v915 = vpack.c.b16 %v901, %v901
    %v916 = vpack.c.b16 %v902, %v902
    %v917 = vpack.c.b16 %v903, %v903
    %vm932 = vcmask 814080
    %933 = vst.msk [vmem:[%s10] sm:$0xf] %vm932, %v904
    %934 = vst.msk [vmem:[%s10 + $0x4] sm:$0xf] %vm932, %v905
    %935 = vst.msk [vmem:[%s10 + $0x8] sm:$0xf] %vm932, %v906
    %936 = vst.msk [vmem:[%s10 + $0xc] sm:$0xf] %vm932, %v907
    %937 = vst.msk [vmem:[%s10 + $0x10] sm:$0xf] %vm932, %v908
    %938 = vst.msk [vmem:[%s10 + $0x14] sm:$0xf] %vm932, %v909
    %939 = vst.msk [vmem:[%s10 + $0x18] sm:$0xf] %vm932, %v910
    %940 = vst.msk [vmem:[%s10 + $0x1c] sm:$0xf] %vm932, %v911
    %941 = vst.msk [vmem:[%s10 + $0x20] sm:$0xf] %vm932, %v912
    %942 = vst.msk [vmem:[%s10 + $0x24] sm:$0xf] %vm932, %v913
    %943 = vst.msk [vmem:[%s10 + $0x28] sm:$0xf] %vm932, %v914
    %944 = vst.msk [vmem:[%s10 + $0x2c] sm:$0xf] %vm932, %v915
    %945 = vst.msk [vmem:[%s10 + $0x30] sm:$0xf] %vm932, %v916
    %vm946 = vcmask 811008
    %vm947 = vsmask.f32 256
    %vm948 = vmand %vm946, %vm947
    %v949 = vld [vmem:[%s10 + $0x34] sm:$0x1]
    %v950 = vsel %vm948, %v917, %v949
    %951 = vst [vmem:[%s10 + $0x34] sm:$0x1] %v950
    // Predicated region
    $region46: #{tpu_custom_call.1} parent=1 // pred_check
      _
    $region47: #{tpu_custom_call.1} parent=1 // pred_check_branch
      %953 = sbr.rel (0) target = $region49
    $region48: #{tpu_custom_call.1} parent=1 // pred_region
      _
    $region49: #{tpu_custom_call.1} parent=1 // pred_fallthru
      _
    // Predicated region
    $region50: #{tpu_custom_call.1} parent=1 // pred_check
      _
    $region51: #{tpu_custom_call.1} parent=1 // pred_check_branch
      %955 = sbr.rel (0) target = $region53
    $region52: #{tpu_custom_call.1} parent=1 // pred_region
      _
    $region53: #{tpu_custom_call.1} parent=1 // pred_fallthru
      _
    %956 = vsyncpa [#allocation3], 1

</llo_original>
